<compile_context>
chip_gen: v7x
topology: tpu7x:2x2x1
jax: 0.10.0
libtpu: 0.0.40
codegen_flags: <defaults>
</compile_context>

<pallas_src>
import jax
import jax.numpy as jnp
from jax.experimental import pallas as pl
from jax.experimental.pallas import tpu as pltpu

IN_DIM = 18
H1 = 20
H2 = 50
OUT = 3


def sdss_kernel(xT_ref, w1_ref, b1_ref, w2_ref, b2_ref, w3_ref, b3_ref, o_ref):
    xT = xT_ref[...]  # (IN_DIM, tb) — batch on lanes

    # layer1 + ReLU : (H1, IN_DIM) @ (IN_DIM, tb) -> (H1, tb)
    h1 = jnp.dot(w1_ref[...], xT, preferred_element_type=jnp.float32) + b1_ref[...]
    h1 = jnp.maximum(h1, 0.0)

    # layer2 + ReLU : (H2, H1) @ (H1, tb) -> (H2, tb)
    h2 = jnp.dot(w2_ref[...], h1, preferred_element_type=jnp.float32) + b2_ref[...]
    h2 = jnp.maximum(h2, 0.0)

    # layer3 : (OUT, H2) @ (H2, tb) -> (OUT, tb)
    logits = jnp.dot(w3_ref[...], h2, preferred_element_type=jnp.float32) + b3_ref[...]

    # softmax over the feature axis (PyTorch dim=1) == sublane axis here (3 rows).
    m = jnp.max(logits, axis=0, keepdims=True)
    e = jnp.exp(logits - m)
    denom = jnp.sum(e, axis=0, keepdims=True)
    # exact reciprocal keeps 1e-5 parity with the f32 reference
    # (pl.reciprocal(..., approx=True) is available if looser tolerance is OK).
    o_ref[...] = (e * pl.reciprocal(denom, approx=False)).astype(o_ref.dtype)


def sdss_forward(x, params, *, tb=512):
    """x: (batch, IN_DIM) float32.

    params (PyTorch-native layout):
      w1:(H1,IN_DIM) b1:(H1,1)  w2:(H2,H1) b2:(H2,1)  w3:(OUT,H2) b3:(OUT,1)
    Returns (batch, OUT) float32 softmax probabilities.
    """
    batch = x.shape[0]
    w1, b1, w2, b2, w3, b3 = (
        params["w1"], params["b1"], params["w2"], params["b2"], params["w3"], params["b3"]
    )

    # Batch tile: multiple of 128 (lane-dense); shrink to a single step for small batches.
    tb = max(128, (tb // 128) * 128)
    tb = min(tb, pl.cdiv(batch, 128) * 128)
    padded = pl.cdiv(batch, tb) * tb  # pad batch instead of asserting divisibility

    xT = jnp.transpose(x)                                   # (IN_DIM, batch)
    if padded != batch:
        xT = jnp.pad(xT, ((0, 0), (0, padded - batch)))     # zero-pad lanes (sliced off later)

    grid = (padded // tb,)
    in_specs = [
        pl.BlockSpec((IN_DIM, tb), lambda i: (0, i)),        # x^T : tiled along lanes (batch)
        pl.BlockSpec((H1, IN_DIM), lambda i: (0, 0)),        # weights/biases: full, resident
        pl.BlockSpec((H1, 1), lambda i: (0, 0)),
        pl.BlockSpec((H2, H1), lambda i: (0, 0)),
        pl.BlockSpec((H2, 1), lambda i: (0, 0)),
        pl.BlockSpec((OUT, H2), lambda i: (0, 0)),
        pl.BlockSpec((OUT, 1), lambda i: (0, 0)),
    ]
    out_spec = pl.BlockSpec((OUT, tb), lambda i: (0, i))     # lane-dense output store

    yT = pl.pallas_call(
        sdss_kernel,
        out_shape=jax.ShapeDtypeStruct((OUT, padded), jnp.float32),
        grid_spec=pl.GridSpec(
            grid=grid,
            in_specs=in_specs,
            out_specs=out_spec,
        ),
        compiler_params=pltpu.CompilerParams(
            dimension_semantics=("parallel",),               # shards batch axis across TCs on v7x
        ),
    )(xT, w1, b1, w2, b2, w3, b3)

    # Tiny (OUT, batch) un-transpose in the wrapper — layout plumbing, not compute.
    return jnp.transpose(yT[:, :batch])


def init_params(key):
    """Deterministic init mimicking PyTorch nn.Linear default (uniform +-1/sqrt(fan_in)).

    Weights are kept in PyTorch-native (out_features, in_features) layout; biases (out, 1).
    """
    ks = jax.random.split(key, 6)

    def lin(kw, kb, fan_in, fan_out):
        bound = 1.0 / jnp.sqrt(fan_in)
        w = jax.random.uniform(kw, (fan_out, fan_in), jnp.float32, -bound, bound)
        b = jax.random.uniform(kb, (fan_out, 1), jnp.float32, -bound, bound)
        return w, b

    w1, b1 = lin(ks[0], ks[1], IN_DIM, H1)
    w2, b2 = lin(ks[2], ks[3], H1, H2)
    w3, b3 = lin(ks[4], ks[5], H2, OUT)
    return {"w1": w1, "b1": b1, "w2": w2, "b2": b2, "w3": w3, "b3": b3}


def sdss_ref(x, p):
    h1 = jnp.maximum(x @ p["w1"].T + p["b1"].T, 0.0)
    h2 = jnp.maximum(h1 @ p["w2"].T + p["b2"].T, 0.0)
    return jax.nn.softmax(h2 @ p["w3"].T + p["b3"].T, axis=1)


if __name__ == "__main__":
    key = jax.random.PRNGKey(0)
    kx, kp, kx2 = jax.random.split(key, 3)
    params = init_params(kp)

    # Small, "nice" batch (single grid step, lane-padded to 128).
    batch = 64
    x = jax.random.normal(kx, (batch, IN_DIM), jnp.float32)
    out = jax.block_until_ready(sdss_forward(x, params))
    ref = sdss_ref(x, params)
    assert out.shape == (batch, OUT)
    assert jnp.allclose(out, ref, atol=1e-5, rtol=1e-5), "mismatch vs JAX reference (batch=64)"
    assert jnp.allclose(jnp.sum(out, axis=1), jnp.ones((batch,)), atol=1e-5)

    # Awkward batch exercising the padding path.
    batch2 = 200
    x2 = jax.random.normal(kx2, (batch2, IN_DIM), jnp.float32)
    out2 = jax.block_until_ready(sdss_forward(x2, params))
    ref2 = sdss_ref(x2, params)
    assert out2.shape == (batch2, OUT)
    assert jnp.allclose(out2, ref2, atol=1e-5, rtol=1e-5), "mismatch vs JAX reference (batch=200)"

    print("KERNEL_OK")
</pallas_src>

<mosaic_0001>
module attributes {stable_mosaic.version = 11 : i64} {
  func.func @sdss_kernel(%arg0: i32, %arg1: memref<18x128xf32, #tpu.memory_space<vmem>>, %arg2: memref<20x18xf32, #tpu.memory_space<vmem>>, %arg3: memref<20x1xf32, #tpu.memory_space<vmem>>, %arg4: memref<50x20xf32, #tpu.memory_space<vmem>>, %arg5: memref<50x1xf32, #tpu.memory_space<vmem>>, %arg6: memref<3x50xf32, #tpu.memory_space<vmem>>, %arg7: memref<3x1xf32, #tpu.memory_space<vmem>>, %arg8: memref<3x128xf32, #tpu.memory_space<vmem>>) attributes {dimension_semantics = [#tpu.dimension_semantics<parallel>], iteration_bounds = array<i64: 1>, scalar_prefetch = 0 : i64, scratch_operands = 0 : i64, tpu.core_type = #tpu.core_type<tc>, window_params = [{transform_indices = @transform_0, window_bounds = array<i64: 18, 128>}, {pipeline_mode = #tpu.pipeline_mode<synchronous>, transform_indices = @transform_1, window_bounds = array<i64: 20, 18>}, {pipeline_mode = #tpu.pipeline_mode<synchronous>, transform_indices = @transform_2, window_bounds = array<i64: 20, 1>}, {pipeline_mode = #tpu.pipeline_mode<synchronous>, transform_indices = @transform_3, window_bounds = array<i64: 50, 20>}, {pipeline_mode = #tpu.pipeline_mode<synchronous>, transform_indices = @transform_4, window_bounds = array<i64: 50, 1>}, {pipeline_mode = #tpu.pipeline_mode<synchronous>, transform_indices = @transform_5, window_bounds = array<i64: 3, 50>}, {pipeline_mode = #tpu.pipeline_mode<synchronous>, transform_indices = @transform_6, window_bounds = array<i64: 3, 1>}, {transform_indices = @transform_7, window_bounds = array<i64: 3, 128>}]} {
    %c0 = arith.constant 0 : index
    %c0_0 = arith.constant 0 : index
    %0 = vector.load %arg1[%c0, %c0_0] : memref<18x128xf32, #tpu.memory_space<vmem>>, vector<18x128xf32>
    %c0_1 = arith.constant 0 : index
    %c0_2 = arith.constant 0 : index
    %1 = vector.load %arg2[%c0_1, %c0_2] : memref<20x18xf32, #tpu.memory_space<vmem>>, vector<20x18xf32>
    %cst = arith.constant dense<0.000000e+00> : vector<20x128xf32>
    %2 = tpu.matmul %1, %0, %cst {dimension_numbers = #tpu.dot_dimension_numbers<[1], [0], [0], [1], [0, 0, 1, 1], [], []>} : vector<20x18xf32>, vector<18x128xf32>, vector<20x128xf32> -> vector<20x128xf32>
    %c0_3 = arith.constant 0 : index
    %c0_4 = arith.constant 0 : index
    %3 = vector.load %arg3[%c0_3, %c0_4] : memref<20x1xf32, #tpu.memory_space<vmem>>, vector<20x1xf32>
    %4 = vector.broadcast %3 : vector<20x1xf32> to vector<20x128xf32>
    %5 = arith.addf %2, %4 : vector<20x128xf32>
    %cst_5 = arith.constant 0.000000e+00 : f32
    %6 = vector.broadcast %cst_5 : f32 to vector<20x128xf32>
    %7 = arith.maximumf %5, %6 : vector<20x128xf32>
    %c0_6 = arith.constant 0 : index
    %c0_7 = arith.constant 0 : index
    %8 = vector.load %arg4[%c0_6, %c0_7] : memref<50x20xf32, #tpu.memory_space<vmem>>, vector<50x20xf32>
    %cst_8 = arith.constant dense<0.000000e+00> : vector<50x128xf32>
    %9 = tpu.matmul %8, %7, %cst_8 {dimension_numbers = #tpu.dot_dimension_numbers<[1], [0], [0], [1], [0, 0, 1, 1], [], []>} : vector<50x20xf32>, vector<20x128xf32>, vector<50x128xf32> -> vector<50x128xf32>
    %c0_9 = arith.constant 0 : index
    %c0_10 = arith.constant 0 : index
    %10 = vector.load %arg5[%c0_9, %c0_10] : memref<50x1xf32, #tpu.memory_space<vmem>>, vector<50x1xf32>
    %11 = vector.broadcast %10 : vector<50x1xf32> to vector<50x128xf32>
    %12 = arith.addf %9, %11 : vector<50x128xf32>
    %cst_11 = arith.constant 0.000000e+00 : f32
    %13 = vector.broadcast %cst_11 : f32 to vector<50x128xf32>
    %14 = arith.maximumf %12, %13 : vector<50x128xf32>
    %c0_12 = arith.constant 0 : index
    %c0_13 = arith.constant 0 : index
    %15 = vector.load %arg6[%c0_12, %c0_13] : memref<3x50xf32, #tpu.memory_space<vmem>>, vector<3x50xf32>
    %cst_14 = arith.constant dense<0.000000e+00> : vector<3x128xf32>
    %16 = tpu.matmul %15, %14, %cst_14 {dimension_numbers = #tpu.dot_dimension_numbers<[1], [0], [0], [1], [0, 0, 1, 1], [], []>} : vector<3x50xf32>, vector<50x128xf32>, vector<3x128xf32> -> vector<3x128xf32>
    %c0_15 = arith.constant 0 : index
    %c0_16 = arith.constant 0 : index
    %17 = vector.load %arg7[%c0_15, %c0_16] : memref<3x1xf32, #tpu.memory_space<vmem>>, vector<3x1xf32>
    %18 = vector.broadcast %17 : vector<3x1xf32> to vector<3x128xf32>
    %19 = arith.addf %16, %18 : vector<3x128xf32>
    %cst_17 = arith.constant dense<0xFF800000> : vector<128xf32>
    %20 = vector.multi_reduction <maximumf>, %19, %cst_17 [0] : vector<3x128xf32> to vector<128xf32>
    %21 = vector.shape_cast %20 : vector<128xf32> to vector<1x128xf32>
    %22 = vector.broadcast %21 : vector<1x128xf32> to vector<3x128xf32>
    %23 = arith.subf %19, %22 : vector<3x128xf32>
    %24 = math.exp %23 : vector<3x128xf32>
    %cst_18 = arith.constant dense<0.000000e+00> : vector<128xf32>
    %25 = vector.multi_reduction <add>, %24, %cst_18 [0] : vector<3x128xf32> to vector<128xf32>
    %26 = vector.shape_cast %25 : vector<128xf32> to vector<1x128xf32>
    %27 = tpu.reciprocal %26 : vector<1x128xf32> -> vector<1x128xf32>
    %28 = vector.broadcast %27 : vector<1x128xf32> to vector<3x128xf32>
    %29 = arith.mulf %24, %28 : vector<3x128xf32>
    %c0_19 = arith.constant 0 : index
    %c0_20 = arith.constant 0 : index
    %30 = vector.load %arg8[%c0_19, %c0_20] : memref<3x128xf32, #tpu.memory_space<vmem>>, vector<3x128xf32>
    tpu.vector_store %arg8[%c0_19, %c0_20], %29 {strides = array<i32>} : memref<3x128xf32, #tpu.memory_space<vmem>>, vector<3x128xf32>,
    return
  }
  func.func @transform_0(%arg0: i32) -> (i32, i32) {
    %c0_i32 = arith.constant 0 : i32
    %c0_i32_0 = arith.constant 0 : i32
    return %c0_i32, %arg0 : i32, i32
  }
  func.func @transform_1(%arg0: i32) -> (i32, i32) {
    %c0_i32 = arith.constant 0 : i32
    %c0_i32_0 = arith.constant 0 : i32
    %c0_i32_1 = arith.constant 0 : i32
    return %c0_i32, %c0_i32_0 : i32, i32
  }
  func.func @transform_2(%arg0: i32) -> (i32, i32) {
    %c0_i32 = arith.constant 0 : i32
    %c0_i32_0 = arith.constant 0 : i32
    %c0_i32_1 = arith.constant 0 : i32
    return %c0_i32, %c0_i32_0 : i32, i32
  }
  func.func @transform_3(%arg0: i32) -> (i32, i32) {
    %c0_i32 = arith.constant 0 : i32
    %c0_i32_0 = arith.constant 0 : i32
    %c0_i32_1 = arith.constant 0 : i32
    return %c0_i32, %c0_i32_0 : i32, i32
  }
  func.func @transform_4(%arg0: i32) -> (i32, i32) {
    %c0_i32 = arith.constant 0 : i32
    %c0_i32_0 = arith.constant 0 : i32
    %c0_i32_1 = arith.constant 0 : i32
    return %c0_i32, %c0_i32_0 : i32, i32
  }
  func.func @transform_5(%arg0: i32) -> (i32, i32) {
    %c0_i32 = arith.constant 0 : i32
    %c0_i32_0 = arith.constant 0 : i32
    %c0_i32_1 = arith.constant 0 : i32
    return %c0_i32, %c0_i32_0 : i32, i32
  }
  func.func @transform_6(%arg0: i32) -> (i32, i32) {
    %c0_i32 = arith.constant 0 : i32
    %c0_i32_0 = arith.constant 0 : i32
    %c0_i32_1 = arith.constant 0 : i32
    return %c0_i32, %c0_i32_0 : i32, i32
  }
  func.func @transform_7(%arg0: i32) -> (i32, i32) {
    %c0_i32 = arith.constant 0 : i32
    %c0_i32_0 = arith.constant 0 : i32
    return %c0_i32, %arg0 : i32, i32
  }
}

</mosaic_0001>

<llo_original>
// kernel: tpu_custom_call.1
$region0: #{tpu_custom_call.1}
  #allocation0 [shape = 'u32[]', space=smem, size = 0x4, offset = 0x4, fixed_abs, tag = 'smem constant byte address 0x4 - core index']
  #allocation1 [shape = 'u32[144,128]{1,0:T(1,128)}', space=vmem, size = 0x12000, scoped, tag = 'internal scratch']
  %s0 = inlined_call_operand.vmem [shape: f32[18,128], index: 0, kind: input, shape index: {}]
  %s1 = inlined_call_operand.vmem [shape: f32[20,18], index: 1, kind: input, shape index: {}]
  %s2 = inlined_call_operand.vmem [shape: f32[20,1], index: 2, kind: input, shape index: {}]
  %s3 = inlined_call_operand.vmem [shape: f32[50,20], index: 3, kind: input, shape index: {}]
  %s4 = inlined_call_operand.vmem [shape: f32[50,1], index: 4, kind: input, shape index: {}]
  %s5 = inlined_call_operand.vmem [shape: f32[3,50], index: 5, kind: input, shape index: {}]
  %s6 = inlined_call_operand.vmem [shape: f32[3,1], index: 6, kind: input, shape index: {}]
  %s7 = inlined_call_operand.hbm [shape: f32[3,128], index: 7, kind: output, shape index: {}]
  %s8 = sld [smem:[#allocation0]]
  $region38: #{tpu_custom_call.1} parent=0
    _
  %s10 = ssub.s32 1, %s8
  %s11 = scalar_select 0, %s10, %s8
  $region1: #{tpu_custom_call.1} parent=0
    #allocation2 [shape = 'u8[2048]{0}', space=vmem, size = 0x800, scoped, tag = 'output window, operand 0, single buffered']
    #allocation3 [shape = 's32[1]{0}', space=sflag, size = 0x4, scoped, tag = 'scoped memory for tpu_custom_call.1']
    %12 = vsyncpa [#allocation3], 0
    // Predicated region
    $region2: #{tpu_custom_call.1} parent=1 // pred_check
      _
    $region3: #{tpu_custom_call.1} parent=1 // pred_check_branch
      %14 = sbr.rel (0) target = $region5
    $region4: #{tpu_custom_call.1} parent=1 // pred_region
      _
    $region5: #{tpu_custom_call.1} parent=1 // pred_fallthru
      _
    // Predicated region
    $region6: #{tpu_custom_call.1} parent=1 // pred_check
      _
    $region7: #{tpu_custom_call.1} parent=1 // pred_check_branch
      %16 = sbr.rel (0) target = $region9
    $region8: #{tpu_custom_call.1} parent=1 // pred_region
      _
    $region9: #{tpu_custom_call.1} parent=1 // pred_fallthru
      _
    // Predicated region
    $region10: #{tpu_custom_call.1} parent=1 // pred_check
      _
    $region11: #{tpu_custom_call.1} parent=1 // pred_check_branch
      %18 = sbr.rel (0) target = $region13
    $region12: #{tpu_custom_call.1} parent=1 // pred_region
      _
    $region13: #{tpu_custom_call.1} parent=1 // pred_fallthru
      _
    // Predicated region
    $region14: #{tpu_custom_call.1} parent=1 // pred_check
      _
    $region15: #{tpu_custom_call.1} parent=1 // pred_check_branch
      %20 = sbr.rel (0) target = $region17
    $region16: #{tpu_custom_call.1} parent=1 // pred_region
      _
    $region17: #{tpu_custom_call.1} parent=1 // pred_fallthru
      _
    // Predicated region
    $region18: #{tpu_custom_call.1} parent=1 // pred_check
      _
    $region19: #{tpu_custom_call.1} parent=1 // pred_check_branch
      %22 = sbr.rel (0) target = $region21
    $region20: #{tpu_custom_call.1} parent=1 // pred_region
      _
    $region21: #{tpu_custom_call.1} parent=1 // pred_fallthru
      _
    // Predicated region
    $region22: #{tpu_custom_call.1} parent=1 // pred_check
      _
    $region23: #{tpu_custom_call.1} parent=1 // pred_check_branch
      %24 = sbr.rel (0) target = $region25
    $region24: #{tpu_custom_call.1} parent=1 // pred_region
      _
    $region25: #{tpu_custom_call.1} parent=1 // pred_fallthru
      _
    // Predicated region
    $region26: #{tpu_custom_call.1} parent=1 // pred_check
      _
    $region27: #{tpu_custom_call.1} parent=1 // pred_check_branch
      %26 = sbr.rel (0) target = $region29
    $region28: #{tpu_custom_call.1} parent=1 // pred_region
      _
    $region29: #{tpu_custom_call.1} parent=1 // pred_fallthru
      _
    %v27 = vld [vmem:[%s0] sm:$0xff]
    %v28 = vld [vmem:[%s0 + $0x8] sm:$0xff]
    %v29 = vld [vmem:[%s0 + $0x10] sm:$0x3]
    %v30 = vld [vmem:[%s1] sm:$0xff]
    %v31 = vld [vmem:[%s1 + $0x8] sm:$0xff]
    %v32 = vld [vmem:[%s1 + $0x10] sm:$0xf]
    %v33 = vld [vmem:[%s2] sm:$0xff]
    %v34 = vld [vmem:[%s2 + $0x8] sm:$0xff]
    %v35 = vld [vmem:[%s2 + $0x10] sm:$0xf]
    %37 = vset.pattern.permute.xlu0 0
    %38 = vperm.xlu0 %37, %v33
    %v39 = vpop.permute.xlu0 %38
    %42 = vset.pattern.permute.xlu0 0
    %43 = vperm.xlu0 %42, %v34
    %v44 = vpop.permute.xlu0 %43
    %47 = vset.pattern.permute.xlu0 0
    %48 = vperm.xlu0 %47, %v35
    %v49 = vpop.permute.xlu0 %48
    %vm51 = vcmask 146432
    %v53 = vsel %vm51, %v30, 0
    %v56 = vsel %vm51, %v31, 0
    %v59 = vsel %vm51, %v32, 0
    %vm61 = vcmask 1041408
    %v63 = vsel %vm61, %v29, 0
    %65 = vmatprep.subr.mxu0 0.0
    %66 = vmatpush1.msra.mxu0 %v27
    %67 = vmatprep.subr.mxu0 0.0
    %68 = vmatpush1.msra.mxu0 %v28
    %69 = vmatprep.subr.mxu0 0.0
    %70 = vmatpush1.msra.mxu0 %v63
    %71 = vmatprep.subr.mxu0 0.0
    %72 = vmatpush1.msra.mxu0 0.0
    %73 = vmatprep.subr.mxu0 0.0
    %74 = vmatpush1.msra.mxu0 0.0
    %75 = vmatprep.subr.mxu0 0.0
    %76 = vmatpush1.msra.mxu0 0.0
    %77 = vmatprep.subr.mxu0 0.0
    %78 = vmatpush1.msra.mxu0 0.0
    %79 = vmatprep.subr.mxu0 0.0
    %80 = vmatpush1.msra.mxu0 0.0
    %81 = vmatprep.subr.mxu0 0.0
    %82 = vmatpush1.msra.mxu0 0.0
    %83 = vmatprep.subr.mxu0 0.0
    %84 = vmatpush1.msra.mxu0 0.0
    %85 = vmatprep.subr.mxu0 0.0
    %86 = vmatpush1.msra.mxu0 0.0
    %87 = vmatprep.subr.mxu0 0.0
    %88 = vmatpush1.msra.mxu0 0.0
    %89 = vmatprep.subr.mxu0 0.0
    %90 = vmatpush1.msra.mxu0 0.0
    %91 = vmatprep.subr.mxu0 0.0
    %92 = vmatpush1.msra.mxu0 0.0
    %93 = vmatprep.subr.mxu0 0.0
    %94 = vmatpush1.msra.mxu0 0.0
    %95 = vmatprep.subr.mxu0 0.0
    %96 = vmatpush1.msra.mxu0 0.0
    %97 = vmatprep.subr.mxu0 0.0
    %98 = vmatpush1.msra.mxu0 0.0
    %99 = vmatprep.subr.mxu0 0.0
    %100 = vmatpush1.msra.mxu0 0.0
    %101 = vmatprep.subr.mxu0 0.0
    %102 = vmatpush1.msra.mxu0 0.0
    %103 = vmatprep.subr.mxu0 0.0
    %104 = vmatpush1.msra.mxu0 0.0
    %105 = vmatprep.subr.mxu0 0.0
    %106 = vmatpush1.msra.mxu0 0.0
    %107 = vmatprep.subr.mxu0 0.0
    %108 = vmatpush1.msra.mxu0 0.0
    %109 = vmatprep.subr.mxu0 0.0
    %110 = vmatpush1.msra.mxu0 0.0
    %111 = vmatprep.subr.mxu0 0.0
    %112 = vmatpush1.msra.mxu0 0.0
    %113 = vmatprep.subr.mxu0 0.0
    %114 = vmatpush1.msra.mxu0 0.0
    %115 = vmatprep.subr.mxu0 0.0
    %116 = vmatpush1.msra.mxu0 0.0
    %117 = vmatprep.subr.mxu0 0.0
    %118 = vmatpush1.msra.mxu0 0.0
    %119 = vmatprep.subr.mxu0 0.0
    %120 = vmatpush1.msra.mxu0 0.0
    %121 = vmatprep.subr.mxu0 0.0
    %122 = vmatpush1.msra.mxu0 0.0
    %123 = vmatprep.subr.mxu0 0.0
    %124 = vmatpush1.msra.mxu0 0.0
    %125 = vmatprep.subr.mxu0 0.0
    %126 = vmatpush1.msra.mxu0 0.0
    %127 = vmatprep.subr.mxu0 0.0
    %128 = vmatpush1.msra.mxu0 0.0
    %129 = vmatprep.mubr.f32.mxu0 0.0
    %130 = vmatmul.mubr.f32.gmra.mrb[0].mxu0 %v53
    %v131 = vpop.f32.mrb[0].mxu0
    %v132 = vadd.f32 %v39, %v131
    %v133 = vpop.f32.mrb[0].mxu0
    %134 = vmatprep.mubr.f32.mxu0 0.0
    %135 = vmatmul.mubr.f32.gmra.mrb[0].mxu0 %v56
    %v136 = vpop.f32.mrb[0].mxu0
    %v137 = vadd.f32 %v44, %v136
    %v138 = vpop.f32.mrb[0].mxu0
    %139 = vmatprep.mubr.f32.mxu0 0.0
    %140 = vmatmul.mubr.f32.gmra.mrb[0].mxu0 %v59
    %v141 = vpop.f32.mrb[0].mxu0
    %v142 = vadd.f32 %v49, %v141
    %v143 = vpop.f32.mrb[0].mxu0
    %144 = vdwg.mxu0
    %v145 = vmax.f32 %v132, 0.0
    %v146 = vmax.f32 %v137, 0.0
    %v147 = vmax.f32 %v142, 0.0
    %v148 = vld [vmem:[%s3] sm:$0xff]
    %v149 = vld [vmem:[%s3 + $0x8] sm:$0xff]
    %v150 = vld [vmem:[%s3 + $0x10] sm:$0xff]
    %v151 = vld [vmem:[%s3 + $0x18] sm:$0xff]
    %v152 = vld [vmem:[%s3 + $0x20] sm:$0xff]
    %v153 = vld [vmem:[%s3 + $0x28] sm:$0xff]
    %v154 = vld [vmem:[%s3 + $0x30] sm:$0x3]
    %v155 = vld [vmem:[%s4] sm:$0xff]
    %v156 = vld [vmem:[%s4 + $0x8] sm:$0xff]
    %v157 = vld [vmem:[%s4 + $0x10] sm:$0xff]
    %v158 = vld [vmem:[%s4 + $0x18] sm:$0xff]
    %v159 = vld [vmem:[%s4 + $0x20] sm:$0xff]
    %v160 = vld [vmem:[%s4 + $0x28] sm:$0xff]
    %v161 = vld [vmem:[%s4 + $0x30] sm:$0x3]
    %163 = vset.pattern.permute.xlu0 0
    %164 = vperm.xlu0 %163, %v155
    %v165 = vpop.permute.xlu0 %164
    %168 = vset.pattern.permute.xlu0 0
    %169 = vperm.xlu0 %168, %v156
    %v170 = vpop.permute.xlu0 %169
    %173 = vset.pattern.permute.xlu0 0
    %174 = vperm.xlu0 %173, %v157
    %v175 = vpop.permute.xlu0 %174
    %178 = vset.pattern.permute.xlu0 0
    %179 = vperm.xlu0 %178, %v158
    %v180 = vpop.permute.xlu0 %179
    %183 = vset.pattern.permute.xlu0 0
    %184 = vperm.xlu0 %183, %v159
    %v185 = vpop.permute.xlu0 %184
    %188 = vset.pattern.permute.xlu0 0
    %189 = vperm.xlu0 %188, %v160
    %v190 = vpop.permute.xlu0 %189
    %193 = vset.pattern.permute.xlu0 0
    %194 = vperm.xlu0 %193, %v161
    %v195 = vpop.permute.xlu0 %194
    %vm197 = vcmask 162816
    %v199 = vsel %vm197, %v148, 0
    %v202 = vsel %vm197, %v149, 0
    %v205 = vsel %vm197, %v150, 0
    %v208 = vsel %vm197, %v151, 0
    %v211 = vsel %vm197, %v152, 0
    %v214 = vsel %vm197, %v153, 0
    %v217 = vsel %vm197, %v154, 0
    %vm219 = vcmask 1043456
    %v221 = vsel %vm219, %v147, 0
    %223 = vmatprep.subr.mxu0 0.0
    %224 = vmatpush1.msra.mxu0 %v145
    %225 = vmatprep.subr.mxu0 0.0
    %226 = vmatpush1.msra.mxu0 %v146
    %227 = vmatprep.subr.mxu0 0.0
    %228 = vmatpush1.msra.mxu0 %v221
    %229 = vmatprep.subr.mxu0 0.0
    %230 = vmatpush1.msra.mxu0 0.0
    %231 = vmatprep.subr.mxu0 0.0
    %232 = vmatpush1.msra.mxu0 0.0
    %233 = vmatprep.subr.mxu0 0.0
    %234 = vmatpush1.msra.mxu0 0.0
    %235 = vmatprep.subr.mxu0 0.0
    %236 = vmatpush1.msra.mxu0 0.0
    %237 = vmatprep.subr.mxu0 0.0
    %238 = vmatpush1.msra.mxu0 0.0
    %239 = vmatprep.subr.mxu0 0.0
    %240 = vmatpush1.msra.mxu0 0.0
    %241 = vmatprep.subr.mxu0 0.0
    %242 = vmatpush1.msra.mxu0 0.0
    %243 = vmatprep.subr.mxu0 0.0
    %244 = vmatpush1.msra.mxu0 0.0
    %245 = vmatprep.subr.mxu0 0.0
    %246 = vmatpush1.msra.mxu0 0.0
    %247 = vmatprep.subr.mxu0 0.0
    %248 = vmatpush1.msra.mxu0 0.0
    %249 = vmatprep.subr.mxu0 0.0
    %250 = vmatpush1.msra.mxu0 0.0
    %251 = vmatprep.subr.mxu0 0.0
    %252 = vmatpush1.msra.mxu0 0.0
    %253 = vmatprep.subr.mxu0 0.0
    %254 = vmatpush1.msra.mxu0 0.0
    %255 = vmatprep.subr.mxu0 0.0
    %256 = vmatpush1.msra.mxu0 0.0
    %257 = vmatprep.subr.mxu0 0.0
    %258 = vmatpush1.msra.mxu0 0.0
    %259 = vmatprep.subr.mxu0 0.0
    %260 = vmatpush1.msra.mxu0 0.0
    %261 = vmatprep.subr.mxu0 0.0
    %262 = vmatpush1.msra.mxu0 0.0
    %263 = vmatprep.subr.mxu0 0.0
    %264 = vmatpush1.msra.mxu0 0.0
    %265 = vmatprep.subr.mxu0 0.0
    %266 = vmatpush1.msra.mxu0 0.0
    %267 = vmatprep.subr.mxu0 0.0
    %268 = vmatpush1.msra.mxu0 0.0
    %269 = vmatprep.subr.mxu0 0.0
    %270 = vmatpush1.msra.mxu0 0.0
    %271 = vmatprep.subr.mxu0 0.0
    %272 = vmatpush1.msra.mxu0 0.0
    %273 = vmatprep.subr.mxu0 0.0
    %274 = vmatpush1.msra.mxu0 0.0
    %275 = vmatprep.subr.mxu0 0.0
    %276 = vmatpush1.msra.mxu0 0.0
    %277 = vmatprep.subr.mxu0 0.0
    %278 = vmatpush1.msra.mxu0 0.0
    %279 = vmatprep.subr.mxu0 0.0
    %280 = vmatpush1.msra.mxu0 0.0
    %281 = vmatprep.subr.mxu0 0.0
    %282 = vmatpush1.msra.mxu0 0.0
    %283 = vmatprep.subr.mxu0 0.0
    %284 = vmatpush1.msra.mxu0 0.0
    %285 = vmatprep.subr.mxu0 0.0
    %286 = vmatpush1.msra.mxu0 0.0
    %287 = vmatprep.mubr.f32.mxu0 0.0
    %288 = vmatmul.mubr.f32.gmra.mrb[0].mxu0 %v199
    %v289 = vpop.f32.mrb[0].mxu0
    %v290 = vadd.f32 %v165, %v289
    %v291 = vpop.f32.mrb[0].mxu0
    %292 = vmatprep.mubr.f32.mxu0 0.0
    %293 = vmatmul.mubr.f32.gmra.mrb[0].mxu0 %v202
    %v294 = vpop.f32.mrb[0].mxu0
    %v295 = vadd.f32 %v170, %v294
    %v296 = vpop.f32.mrb[0].mxu0
    %297 = vmatprep.mubr.f32.mxu0 0.0
    %298 = vmatmul.mubr.f32.gmra.mrb[0].mxu0 %v205
    %v299 = vpop.f32.mrb[0].mxu0
    %v300 = vadd.f32 %v175, %v299
    %v301 = vpop.f32.mrb[0].mxu0
    %302 = vmatprep.mubr.f32.mxu0 0.0
    %303 = vmatmul.mubr.f32.gmra.mrb[0].mxu0 %v208
    %v304 = vpop.f32.mrb[0].mxu0
    %v305 = vadd.f32 %v180, %v304
    %v306 = vpop.f32.mrb[0].mxu0
    %307 = vmatprep.mubr.f32.mxu0 0.0
    %308 = vmatmul.mubr.f32.gmra.mrb[0].mxu0 %v211
    %v309 = vpop.f32.mrb[0].mxu0
    %v310 = vadd.f32 %v185, %v309
    %v311 = vpop.f32.mrb[0].mxu0
    %312 = vmatprep.mubr.f32.mxu0 0.0
    %313 = vmatmul.mubr.f32.gmra.mrb[0].mxu0 %v214
    %v314 = vpop.f32.mrb[0].mxu0
    %v315 = vadd.f32 %v190, %v314
    %v316 = vpop.f32.mrb[0].mxu0
    %317 = vmatprep.mubr.f32.mxu0 0.0
    %318 = vmatmul.mubr.f32.gmra.mrb[0].mxu0 %v217
    %v319 = vpop.f32.mrb[0].mxu0
    %v320 = vadd.f32 %v195, %v319
    %v321 = vpop.f32.mrb[0].mxu0
    %322 = vdwg.mxu0
    %v323 = vmax.f32 %v290, 0.0
    %v324 = vmax.f32 %v295, 0.0
    %v325 = vmax.f32 %v300, 0.0
    %v326 = vmax.f32 %v305, 0.0
    %v327 = vmax.f32 %v310, 0.0
    %v328 = vmax.f32 %v315, 0.0
    %v329 = vmax.f32 %v320, 0.0
    %v330 = vld [vmem:[%s5] sm:$0x7]
    %v331 = vld [vmem:[%s6] sm:$0x7]
    %333 = vset.pattern.permute.xlu0 0
    %334 = vperm.xlu0 %333, %v331
    %v335 = vpop.permute.xlu0 %334
    %vm337 = vcmask 408576
    %v339 = vsel %vm337, %v330, 0
    %v342 = vsel %vm61, %v329, 0
    %344 = vmatprep.subr.mxu0 0.0
    %345 = vmatpush1.msra.mxu0 %v323
    %346 = vmatprep.subr.mxu0 0.0
    %347 = vmatpush1.msra.mxu0 %v324
    %348 = vmatprep.subr.mxu0 0.0
    %349 = vmatpush1.msra.mxu0 %v325
    %350 = vmatprep.subr.mxu0 0.0
    %351 = vmatpush1.msra.mxu0 %v326
    %352 = vmatprep.subr.mxu0 0.0
    %353 = vmatpush1.msra.mxu0 %v327
    %354 = vmatprep.subr.mxu0 0.0
    %355 = vmatpush1.msra.mxu0 %v328
    %356 = vmatprep.subr.mxu0 0.0
    %357 = vmatpush1.msra.mxu0 %v342
    %358 = vmatprep.subr.mxu0 0.0
    %359 = vmatpush1.msra.mxu0 0.0
    %360 = vmatprep.subr.mxu0 0.0
    %361 = vmatpush1.msra.mxu0 0.0
    %362 = vmatprep.subr.mxu0 0.0
    %363 = vmatpush1.msra.mxu0 0.0
    %364 = vmatprep.subr.mxu0 0.0
    %365 = vmatpush1.msra.mxu0 0.0
    %366 = vmatprep.subr.mxu0 0.0
    %367 = vmatpush1.msra.mxu0 0.0
    %368 = vmatprep.subr.mxu0 0.0
    %369 = vmatpush1.msra.mxu0 0.0
    %370 = vmatprep.subr.mxu0 0.0
    %371 = vmatpush1.msra.mxu0 0.0
    %372 = vmatprep.subr.mxu0 0.0
    %373 = vmatpush1.msra.mxu0 0.0
    %374 = vmatprep.subr.mxu0 0.0
    %375 = vmatpush1.msra.mxu0 0.0
    %376 = vmatprep.subr.mxu0 0.0
    %377 = vmatpush1.msra.mxu0 0.0
    %378 = vmatprep.subr.mxu0 0.0
    %379 = vmatpush1.msra.mxu0 0.0
    %380 = vmatprep.subr.mxu0 0.0
    %381 = vmatpush1.msra.mxu0 0.0
    %382 = vmatprep.subr.mxu0 0.0
    %383 = vmatpush1.msra.mxu0 0.0
    %384 = vmatprep.subr.mxu0 0.0
    %385 = vmatpush1.msra.mxu0 0.0
    %386 = vmatprep.subr.mxu0 0.0
    %387 = vmatpush1.msra.mxu0 0.0
    %388 = vmatprep.subr.mxu0 0.0
    %389 = vmatpush1.msra.mxu0 0.0
    %390 = vmatprep.subr.mxu0 0.0
    %391 = vmatpush1.msra.mxu0 0.0
    %392 = vmatprep.subr.mxu0 0.0
    %393 = vmatpush1.msra.mxu0 0.0
    %394 = vmatprep.subr.mxu0 0.0
    %395 = vmatpush1.msra.mxu0 0.0
    %396 = vmatprep.subr.mxu0 0.0
    %397 = vmatpush1.msra.mxu0 0.0
    %398 = vmatprep.subr.mxu0 0.0
    %399 = vmatpush1.msra.mxu0 0.0
    %400 = vmatprep.subr.mxu0 0.0
    %401 = vmatpush1.msra.mxu0 0.0
    %402 = vmatprep.subr.mxu0 0.0
    %403 = vmatpush1.msra.mxu0 0.0
    %404 = vmatprep.subr.mxu0 0.0
    %405 = vmatpush1.msra.mxu0 0.0
    %406 = vmatprep.subr.mxu0 0.0
    %407 = vmatpush1.msra.mxu0 0.0
    %408 = vmatprep.mubr.f32.mxu0 0.0
    %409 = vmatmul.mubr.f32.gmra.mrb[0].mxu0 %v339
    %v410 = vpop.f32.mrb[0].mxu0
    %v411 = vadd.f32 %v335, %v410
    %v412 = vpop.f32.mrb[0].mxu0
    %413 = vdwg.mxu0
    %vm414 = vcmask 1042432
    %v415 = vsel %vm414, %v411, -inf
    %v416 = vrot.slane %v415, 4
    %v417 = vmax.f32 %v415, %v416
    %v418 = vrot.slane %v417, 2
    %v419 = vmax.f32 %v417, %v418
    %v420 = vrot.slane %v419, 1
    %v421 = vmax.f32 %v419, %v420
    %v422 = vsub.f32 %v411, %v421
    %v423 = vmul.f32 %v422, 1.442695
    %v424 = vpow.pop %v423
    %v425 = vsel %vm414, %v424, 0.0
    %v426 = vrot.slane %v425, 4
    %v427 = vadd.f32 %v425, %v426
    %v428 = vrot.slane %v427, 2
    %v429 = vadd.f32 %v427, %v428
    %v430 = vrot.slane %v429, 1
    %v431 = vadd.f32 %v429, %v430
    %v432 = vrcp.pop %v431
    %v433 = vmul.f32 %v424, %v432
    %434 = vst [vmem:[#allocation2] sm:$0x7] %v433
    // Predicated region
    $region30: #{tpu_custom_call.1} parent=1 // pred_check
      _
    $region31: #{tpu_custom_call.1} parent=1 // pred_check_branch
      %436 = sbr.rel (0) target = $region33
    $region32: #{tpu_custom_call.1} parent=1 // pred_region
      %s438 = ssub.s32 64, 64
      %439 = vsyncadd [#allocation3], %s438
      %s441 = sshll.u32 [#allocation2], 4
      %s442 = int_to_ptr.vmem [resolvable:$true] %s441
      %444 = dma.vmem_to_hbm [thread:$0]  %s442, 64, %s7, [#allocation3]
    $region33: #{tpu_custom_call.1} parent=1 // pred_fallthru
      _
    // Predicated region
    $region34: #{tpu_custom_call.1} parent=1 // pred_check
      _
    $region35: #{tpu_custom_call.1} parent=1 // pred_check_branch
      %446 = sbr.rel (0) target = $region37
    $region36: #{tpu_custom_call.1} parent=1 // pred_region
      %447 = dma.done [#allocation3], 64
    $region37: #{tpu_custom_call.1} parent=1 // pred_fallthru
      _
    %448 = vsyncpa [#allocation3], 1

</llo_original>
